<compile_context>
chip_gen: v7x
topology: tpu7x:2x2x1
jax: 0.10.0
libtpu: 0.0.40
codegen_flags: <defaults>
</compile_context>

<pallas_src>
import jax
import jax.numpy as jnp
from jax.experimental import pallas as pl
from jax.experimental.pallas import tpu as pltpu

E_SIZE = 16   # args.e_size
H_SIZE = 32   # args.h_size


def gru_online_fused_kernel(xs_ref, h0_ref,
                            w_gi_ref, b_gi_ref,
                            w_hh_ref, b_hn_ref,
                            w_out_ref, b_out_ref,
                            ys_ref, h_out_ref,
                            gi_ref, hs_ref):
    T = xs_ref.shape[0]          # static
    H = h0_ref.shape[1]          # static

    # ---- Batched, h-independent work: OFF the serial critical path ----------
    # All input-to-hidden gate pre-activations at once: (T, E) @ (E, 3H) + (1, 3H).
    gi_ref[...] = (jnp.dot(xs_ref[...], w_gi_ref[...],
                           preferred_element_type=jnp.float32) + b_gi_ref[...])

    # Weights used inside the recurrence are loaded into vregs once.
    w_hh = w_hh_ref[...]         # (H, 3H)  hidden-to-hidden, gate-concatenated
    b_hn = b_hn_ref[...]         # (1, H)   only the n-gate hidden bias stays in-loop

    def step(t, h):
        gi = gi_ref[pl.ds(t, 1), :]                                        # (1, 3H)
        gh = jnp.dot(h, w_hh, preferred_element_type=jnp.float32)          # (1, 3H)
        # PyTorch GRU semantics, gate order (r, z, n); b_hr/b_hz already folded
        # into gi offline, b_hn must stay inside the r-multiplied term:
        #   r = sigmoid(W_ir x + b_ir + W_hr h + b_hr)
        #   z = sigmoid(W_iz x + b_iz + W_hz h + b_hz)
        #   n = tanh  (W_in x + b_in + r * (W_hn h + b_hn))
        #   h' = (1 - z) * n + z * h  ==  n + z * (h - n)
        rz = jax.nn.sigmoid(gi[:, 0:2 * H] + gh[:, 0:2 * H])   # one 64-lane EUP push
        r = rz[:, 0:H]
        z = rz[:, H:2 * H]
        n = jnp.tanh(gi[:, 2 * H:3 * H] + r * (gh[:, 2 * H:3 * H] + b_hn))
        h_new = n + z * (h - n)
        hs_ref[pl.ds(t, 1), :] = h_new                          # cheap VMEM row store
        return h_new

    h_final = jax.lax.fori_loop(0, T, step, h0_ref[...], unroll=min(T, 8))
    h_out_ref[...] = h_final

    # ---- Deferred output projection: one (T, H) @ (H, E) matmul -------------
    ys_ref[...] = (jnp.dot(hs_ref[...], w_out_ref[...],
                           preferred_element_type=jnp.float32) + b_out_ref[...])


def _padded_f32_bytes(rows, cols):
    """VMEM footprint of an f32 (rows, cols) tile after (8, 128) padding."""
    return ((rows + 7) // 8) * 8 * ((cols + 127) // 128) * 128 * 4


def _fused_call(T):
    vmem = lambda: pl.BlockSpec(memory_space=pltpu.MemorySpace.VMEM)
    # Scoped-VMEM budget (everything is whole-array resident; no grid, no
    # double-buffering): activation slabs + scratch + weights, padded, x2 margin.
    slabs = (2 * _padded_f32_bytes(T, E_SIZE)            # xs, ys
             + _padded_f32_bytes(T, 3 * H_SIZE)          # gi scratch
             + _padded_f32_bytes(T, H_SIZE))             # hs scratch
    weights = (2 * _padded_f32_bytes(1, H_SIZE)          # h0, h_out
               + _padded_f32_bytes(E_SIZE, 3 * H_SIZE)   # w_gi
               + _padded_f32_bytes(1, 3 * H_SIZE)        # b_gi
               + _padded_f32_bytes(H_SIZE, 3 * H_SIZE)   # w_hh
               + _padded_f32_bytes(1, H_SIZE)            # b_hn
               + _padded_f32_bytes(H_SIZE, E_SIZE)       # w_out
               + _padded_f32_bytes(1, E_SIZE))           # b_out
    vmem_limit = min(max(2 * (slabs + weights) + (1 << 20), 4 << 20), 64 << 20)

    return pl.pallas_call(
        gru_online_fused_kernel,
        out_shape=(jax.ShapeDtypeStruct((T, E_SIZE), jnp.float32),
                   jax.ShapeDtypeStruct((1, H_SIZE), jnp.float32)),
        in_specs=[vmem() for _ in range(8)],
        out_specs=(vmem(), vmem()),
        scratch_shapes=[pltpu.VMEM((T, 3 * H_SIZE), jnp.float32),   # gi_all
                        pltpu.VMEM((T, H_SIZE), jnp.float32)],      # hs
        compiler_params=pltpu.CompilerParams(vmem_limit_bytes=vmem_limit),
    )


def init_params(key):
    """Deterministic init mirroring the PyTorch module's parameter shapes
    (weights stored pre-transposed / gate-stacked)."""
    ks = jax.random.split(key, 10)
    s_e = float(E_SIZE) ** -0.5
    s_h = float(H_SIZE) ** -0.5

    def u(k, shape, scale):
        return jax.random.uniform(k, shape, jnp.float32, -scale, scale)

    return {
        "w_in":  u(ks[0], (E_SIZE, H_SIZE), s_e),      # nn.Linear(e, h).weight.T
        "b_in":  u(ks[1], (1, H_SIZE), s_e),           # nn.Linear(e, h).bias
        "w_ih":  u(ks[2], (3, H_SIZE, H_SIZE), s_h),   # weight_ih_l0 (per-gate, transposed)
        "b_ih":  u(ks[3], (3, 1, H_SIZE), s_h),        # bias_ih_l0 (per-gate)
        "w_hh":  u(ks[4], (3, H_SIZE, H_SIZE), s_h),   # weight_hh_l0 (per-gate, transposed)
        "b_hh":  u(ks[5], (3, 1, H_SIZE), s_h),        # bias_hh_l0 (per-gate)
        "w_out": u(ks[6], (H_SIZE, E_SIZE), s_h),      # nn.Linear(h, e).weight.T
        "b_out": u(ks[7], (1, E_SIZE), s_h),           # nn.Linear(h, e).bias
    }


def pack_params(p):
    """Offline packing (exact affine fusion, changes only f32 rounding order):
      * gates concatenated along lanes -> (·, 3H) matmuls,
      * input Linear folded into the input-to-hidden matmul,
      * hidden-gate biases b_hr, b_hz folded into b_gi (only b_hn must remain
        inside the r-multiplied term at runtime)."""
    w_ih_cat = jnp.concatenate([p["w_ih"][g] for g in range(3)], axis=1)  # (H, 3H)
    b_ih_cat = jnp.concatenate([p["b_ih"][g] for g in range(3)], axis=1)  # (1, 3H)
    w_hh_cat = jnp.concatenate([p["w_hh"][g] for g in range(3)], axis=1)  # (H, 3H)
    b_hrz = jnp.concatenate([p["b_hh"][0], p["b_hh"][1],
                             jnp.zeros((1, H_SIZE), jnp.float32)], axis=1)  # (1, 3H)
    return {
        "w_gi": p["w_in"] @ w_ih_cat,                          # (E, 3H)
        "b_gi": p["b_in"] @ w_ih_cat + b_ih_cat + b_hrz,       # (1, 3H)
        "w_hh": w_hh_cat,                                      # (H, 3H)  (no bias at runtime)
        "b_hn": p["b_hh"][2],                                  # (1, H)
        "w_out": p["w_out"],                                   # (H, E)
        "b_out": p["b_out"],                                   # (1, E)
    }


def gru_online_scan(xs, packed, h=None):
    """T online GRU steps (the module's forward applied sequentially), fused
    into a single pallas_call.  xs: (T, e_size) -> (ys (T, e_size), h (1,1,h))."""
    xs = xs.reshape(xs.shape[0], -1).astype(jnp.float32)
    assert xs.shape[1] == E_SIZE
    h2 = (jnp.zeros((1, H_SIZE), jnp.float32) if h is None
          else h.reshape(1, H_SIZE).astype(jnp.float32))
    ys, h_new = _fused_call(xs.shape[0])(
        xs, h2,
        packed["w_gi"], packed["b_gi"],
        packed["w_hh"], packed["b_hn"],
        packed["w_out"], packed["b_out"])
    return ys, h_new.reshape(1, 1, H_SIZE)


def gru_online_forward(x, packed, h=None):
    """Exact GRUOnline.forward semantics: x.view(1,-1) -> (y (1,e), h (1,1,h)).
    NOTE: for true online use, batch as many steps as available into
    gru_online_scan — a single step is launch/DMA dominated."""
    return gru_online_scan(x.reshape(1, -1), packed, h)


# --------------------------- pure-JAX reference ---------------------------

def ref_forward(x, params, h=None):
    """Unfolded, per-gate reference with identical semantics (for validation)."""
    x1 = x.reshape(1, -1).astype(jnp.float32) @ params["w_in"] + params["b_in"]
    h0 = (jnp.zeros((1, H_SIZE), jnp.float32) if h is None
          else h.reshape(1, H_SIZE).astype(jnp.float32))
    gi = [x1 @ params["w_ih"][g] + params["b_ih"][g] for g in range(3)]
    gh = [h0 @ params["w_hh"][g] + params["b_hh"][g] for g in range(3)]
    r = jax.nn.sigmoid(gi[0] + gh[0])
    z = jax.nn.sigmoid(gi[1] + gh[1])
    n = jnp.tanh(gi[2] + r * gh[2])
    h_new = (1.0 - z) * n + z * h0
    y = h_new @ params["w_out"] + params["b_out"]
    return y, h_new.reshape(1, 1, H_SIZE)


def ref_scan(xs, params, h=None):
    ys = []
    for t in range(xs.shape[0]):
        y, h = ref_forward(xs[t], params, h)
        ys.append(y)
    return jnp.concatenate(ys, axis=0), h


if __name__ == "__main__":
    key = jax.random.PRNGKey(0)
    k_p, k_x, k_s = jax.random.split(key, 3)
    params = init_params(k_p)
    packed = pack_params(params)

    # Single module step (any input that flattens to e_size elements).
    x = jax.random.normal(k_x, (4, 4), jnp.float32)
    y1, h1 = gru_online_forward(x, packed, h=None)       # h=None -> zeros init
    y2, h2 = gru_online_forward(x, packed, h=h1)         # online reuse of h

    # Fused online sequence: T=8 module steps in one pallas_call.
    T = 8
    xs = jax.random.normal(k_s, (T, E_SIZE), jnp.float32)
    ys, hT = gru_online_scan(xs, packed, h=None)
    jax.block_until_ready((y1, h1, y2, h2, ys, hT))

    # Validate against the pure-JAX (unfolded, per-gate) reference.
    ry1, rh1 = ref_forward(x, params, h=None)
    ry2, rh2 = ref_forward(x, params, h=rh1)
    rys, rhT = ref_scan(xs, params, h=None)
    assert y1.shape == (1, E_SIZE) and h1.shape == (1, 1, H_SIZE)
    assert ys.shape == (T, E_SIZE) and hT.shape == (1, 1, H_SIZE)
    assert jnp.allclose(y1, ry1, atol=1e-5), "y (step 1) mismatch"
    assert jnp.allclose(h1, rh1, atol=1e-5), "h (step 1) mismatch"
    assert jnp.allclose(y2, ry2, atol=1e-5), "y (step 2) mismatch"
    assert jnp.allclose(h2, rh2, atol=1e-5), "h (step 2) mismatch"
    assert jnp.allclose(ys, rys, atol=1e-5), "y (fused scan) mismatch"
    assert jnp.allclose(hT, rhT, atol=1e-5), "h (fused scan) mismatch"

    print("KERNEL_OK")
</pallas_src>

<mosaic_0001>
module attributes {stable_mosaic.version = 11 : i64} {
  func.func @gru_online_fused_kernel(%arg0: memref<1x16xf32, #tpu.memory_space<vmem>>, %arg1: memref<1x32xf32, #tpu.memory_space<vmem>>, %arg2: memref<16x96xf32, #tpu.memory_space<vmem>>, %arg3: memref<1x96xf32, #tpu.memory_space<vmem>>, %arg4: memref<32x96xf32, #tpu.memory_space<vmem>>, %arg5: memref<1x32xf32, #tpu.memory_space<vmem>>, %arg6: memref<32x16xf32, #tpu.memory_space<vmem>>, %arg7: memref<1x16xf32, #tpu.memory_space<vmem>>, %arg8: memref<1x16xf32, #tpu.memory_space<vmem>>, %arg9: memref<1x32xf32, #tpu.memory_space<vmem>>, %arg10: memref<1x96xf32, #tpu.memory_space<vmem>>, %arg11: memref<1x32xf32, #tpu.memory_space<vmem>>) attributes {dimension_semantics = [], scalar_prefetch = 0 : i64, scratch_operands = 2 : i64, tpu.core_type = #tpu.core_type<tc>} {
    %c0 = arith.constant 0 : index
    %c0_0 = arith.constant 0 : index
    %0 = vector.load %arg0[%c0, %c0_0] : memref<1x16xf32, #tpu.memory_space<vmem>>, vector<1x16xf32>
    %c0_1 = arith.constant 0 : index
    %c0_2 = arith.constant 0 : index
    %1 = vector.load %arg2[%c0_1, %c0_2] : memref<16x96xf32, #tpu.memory_space<vmem>>, vector<16x96xf32>
    %cst = arith.constant dense<0.000000e+00> : vector<1x96xf32>
    %2 = tpu.matmul %0, %1, %cst {dimension_numbers = #tpu.dot_dimension_numbers<[1], [0], [0], [1], [0, 0, 1, 1], [], []>} : vector<1x16xf32>, vector<16x96xf32>, vector<1x96xf32> -> vector<1x96xf32>
    %c0_3 = arith.constant 0 : index
    %c0_4 = arith.constant 0 : index
    %3 = vector.load %arg3[%c0_3, %c0_4] : memref<1x96xf32, #tpu.memory_space<vmem>>, vector<1x96xf32>
    %4 = arith.addf %2, %3 : vector<1x96xf32>
    %c0_5 = arith.constant 0 : index
    %c0_6 = arith.constant 0 : index
    %5 = vector.load %arg10[%c0_5, %c0_6] : memref<1x96xf32, #tpu.memory_space<vmem>>, vector<1x96xf32>
    tpu.vector_store %arg10[%c0_5, %c0_6], %4 {strides = array<i32>} : memref<1x96xf32, #tpu.memory_space<vmem>>, vector<1x96xf32>,
    %c0_7 = arith.constant 0 : index
    %c0_8 = arith.constant 0 : index
    %6 = vector.load %arg4[%c0_7, %c0_8] : memref<32x96xf32, #tpu.memory_space<vmem>>, vector<32x96xf32>
    %c0_9 = arith.constant 0 : index
    %c0_10 = arith.constant 0 : index
    %7 = vector.load %arg5[%c0_9, %c0_10] : memref<1x32xf32, #tpu.memory_space<vmem>>, vector<1x32xf32>
    %c0_11 = arith.constant 0 : index
    %c0_12 = arith.constant 0 : index
    %8 = vector.load %arg1[%c0_11, %c0_12] : memref<1x32xf32, #tpu.memory_space<vmem>>, vector<1x32xf32>
    %c0_i32 = arith.constant 0 : i32
    %9 = arith.index_cast %c0_i32 : i32 to index
    %c0_13 = arith.constant 0 : index
    %10 = vector.load %arg10[%9, %c0_13] : memref<1x96xf32, #tpu.memory_space<vmem>>, vector<1x96xf32>
    %cst_14 = arith.constant dense<0.000000e+00> : vector<1x96xf32>
    %11 = tpu.matmul %8, %6, %cst_14 {dimension_numbers = #tpu.dot_dimension_numbers<[1], [0], [0], [1], [0, 0, 1, 1], [], []>} : vector<1x32xf32>, vector<32x96xf32>, vector<1x96xf32> -> vector<1x96xf32>
    %12 = vector.extract_strided_slice %10 {offsets = [0, 0], sizes = [1, 64], strides = [1, 1]} : vector<1x96xf32> to vector<1x64xf32>
    %13 = vector.extract_strided_slice %11 {offsets = [0, 0], sizes = [1, 64], strides = [1, 1]} : vector<1x96xf32> to vector<1x64xf32>
    %14 = arith.addf %12, %13 : vector<1x64xf32>
    %15 = arith.negf %14 : vector<1x64xf32>
    %16 = math.exp %15 : vector<1x64xf32>
    %cst_15 = arith.constant 1.000000e+00 : f32
    %17 = vector.broadcast %cst_15 : f32 to vector<1x64xf32>
    %18 = arith.addf %17, %16 : vector<1x64xf32>
    %19 = arith.divf %17, %18 : vector<1x64xf32>
    %20 = vector.extract_strided_slice %19 {offsets = [0, 0], sizes = [1, 32], strides = [1, 1]} : vector<1x64xf32> to vector<1x32xf32>
    %21 = vector.extract_strided_slice %19 {offsets = [0, 32], sizes = [1, 32], strides = [1, 1]} : vector<1x64xf32> to vector<1x32xf32>
    %22 = vector.extract_strided_slice %10 {offsets = [0, 64], sizes = [1, 32], strides = [1, 1]} : vector<1x96xf32> to vector<1x32xf32>
    %23 = vector.extract_strided_slice %11 {offsets = [0, 64], sizes = [1, 32], strides = [1, 1]} : vector<1x96xf32> to vector<1x32xf32>
    %24 = arith.addf %23, %7 : vector<1x32xf32>
    %25 = arith.mulf %20, %24 : vector<1x32xf32>
    %26 = arith.addf %22, %25 : vector<1x32xf32>
    %27 = math.tanh %26 : vector<1x32xf32>
    %28 = arith.subf %8, %27 : vector<1x32xf32>
    %29 = arith.mulf %21, %28 : vector<1x32xf32>
    %30 = arith.addf %27, %29 : vector<1x32xf32>
    %31 = arith.index_cast %c0_i32 : i32 to index
    %c0_16 = arith.constant 0 : index
    %32 = vector.load %arg11[%31, %c0_16] : memref<1x32xf32, #tpu.memory_space<vmem>>, vector<1x32xf32>
    tpu.vector_store %arg11[%31, %c0_16], %30 {strides = array<i32>} : memref<1x32xf32, #tpu.memory_space<vmem>>, vector<1x32xf32>,
    %c1_i32 = arith.constant 1 : i32
    %c0_17 = arith.constant 0 : index
    %c0_18 = arith.constant 0 : index
    %33 = vector.load %arg9[%c0_17, %c0_18] : memref<1x32xf32, #tpu.memory_space<vmem>>, vector<1x32xf32>
    tpu.vector_store %arg9[%c0_17, %c0_18], %30 {strides = array<i32>} : memref<1x32xf32, #tpu.memory_space<vmem>>, vector<1x32xf32>,
    %c0_19 = arith.constant 0 : index
    %c0_20 = arith.constant 0 : index
    %34 = vector.load %arg11[%c0_19, %c0_20] : memref<1x32xf32, #tpu.memory_space<vmem>>, vector<1x32xf32>
    %c0_21 = arith.constant 0 : index
    %c0_22 = arith.constant 0 : index
    %35 = vector.load %arg6[%c0_21, %c0_22] : memref<32x16xf32, #tpu.memory_space<vmem>>, vector<32x16xf32>
    %cst_23 = arith.constant dense<0.000000e+00> : vector<1x16xf32>
    %36 = tpu.matmul %34, %35, %cst_23 {dimension_numbers = #tpu.dot_dimension_numbers<[1], [0], [0], [1], [0, 0, 1, 1], [], []>} : vector<1x32xf32>, vector<32x16xf32>, vector<1x16xf32> -> vector<1x16xf32>
    %c0_24 = arith.constant 0 : index
    %c0_25 = arith.constant 0 : index
    %37 = vector.load %arg7[%c0_24, %c0_25] : memref<1x16xf32, #tpu.memory_space<vmem>>, vector<1x16xf32>
    %38 = arith.addf %36, %37 : vector<1x16xf32>
    %c0_26 = arith.constant 0 : index
    %c0_27 = arith.constant 0 : index
    %39 = vector.load %arg8[%c0_26, %c0_27] : memref<1x16xf32, #tpu.memory_space<vmem>>, vector<1x16xf32>
    tpu.vector_store %arg8[%c0_26, %c0_27], %38 {strides = array<i32>} : memref<1x16xf32, #tpu.memory_space<vmem>>, vector<1x16xf32>,
    return
  }
}

</mosaic_0001>

<llo_original>
// kernel: tpu_custom_call.1
$region0: #{tpu_custom_call.1}
  #allocation0 [shape = 'u32[]', space=smem, size = 0x4, offset = 0x4, fixed_abs, tag = 'smem constant byte address 0x4 - core index']
  #allocation1 [shape = 'u32[144,128]{1,0:T(1,128)}', space=vmem, size = 0x12000, scoped, tag = 'internal scratch']
  #allocation2 [shape = 'f32[1,96]{1,0:T(1,128)}', space=vmem, size = 0x200, scoped, tag = 'scratch operand']
  #allocation3 [shape = 'f32[1,32]{1,0:T(1,128)}', space=vmem, size = 0x200, scoped, tag = 'scratch operand']
  %s0 = inlined_call_operand.vmem [shape: f32[1,16], index: 0, kind: input, shape index: {}]
  %s1 = inlined_call_operand.vmem [shape: f32[1,32], index: 1, kind: input, shape index: {}]
  %s2 = inlined_call_operand.vmem [shape: f32[16,96], index: 2, kind: input, shape index: {}]
  %s3 = inlined_call_operand.vmem [shape: f32[1,96], index: 3, kind: input, shape index: {}]
  %s4 = inlined_call_operand.vmem [shape: f32[32,96], index: 4, kind: input, shape index: {}]
  %s5 = inlined_call_operand.vmem [shape: f32[1,32], index: 5, kind: input, shape index: {}]
  %s6 = inlined_call_operand.vmem [shape: f32[32,16], index: 6, kind: input, shape index: {}]
  %s7 = inlined_call_operand.vmem [shape: f32[1,16], index: 7, kind: input, shape index: {}]
  %s8 = inlined_call_operand.hbm [shape: f32[1,16], index: 8, kind: output, shape index: {0}]
  %s9 = inlined_call_operand.hbm [shape: f32[1,32], index: 9, kind: output, shape index: {1}]
  %10 = xla_tuple %s8, %s9
  %s11 = sld [smem:[#allocation0]]
  $region50: #{tpu_custom_call.1} parent=0
    _
  %s13 = ssub.s32 1, %s11
  %s14 = scalar_select 0, %s13, %s11
  $region1: #{tpu_custom_call.1} parent=0
    #allocation4 [shape = 'u8[512]{0}', space=vmem, size = 0x400, scoped, tag = 'output window, operand 0, single buffered']
    #allocation5 [shape = 's32[1]{0}', space=sflag, size = 0x4, scoped, tag = 'scoped memory for tpu_custom_call.1']
    #allocation6 [shape = 'u8[512]{0}', space=vmem, size = 0x400, scoped, tag = 'output window, operand 1, single buffered']
    #allocation7 [shape = 's32[1]{0}', space=sflag, size = 0x4, scoped, tag = 'scoped memory for tpu_custom_call.1']
    %15 = vsyncpa [#allocation5], 0
    %16 = vsyncpa [#allocation7], 0
    // Predicated region
    $region2: #{tpu_custom_call.1} parent=1 // pred_check
      _
    $region3: #{tpu_custom_call.1} parent=1 // pred_check_branch
      %18 = sbr.rel (0) target = $region5
    $region4: #{tpu_custom_call.1} parent=1 // pred_region
      _
    $region5: #{tpu_custom_call.1} parent=1 // pred_fallthru
      _
    // Predicated region
    $region6: #{tpu_custom_call.1} parent=1 // pred_check
      _
    $region7: #{tpu_custom_call.1} parent=1 // pred_check_branch
      %20 = sbr.rel (0) target = $region9
    $region8: #{tpu_custom_call.1} parent=1 // pred_region
      _
    $region9: #{tpu_custom_call.1} parent=1 // pred_fallthru
      _
    // Predicated region
    $region10: #{tpu_custom_call.1} parent=1 // pred_check
      _
    $region11: #{tpu_custom_call.1} parent=1 // pred_check_branch
      %22 = sbr.rel (0) target = $region13
    $region12: #{tpu_custom_call.1} parent=1 // pred_region
      _
    $region13: #{tpu_custom_call.1} parent=1 // pred_fallthru
      _
    // Predicated region
    $region14: #{tpu_custom_call.1} parent=1 // pred_check
      _
    $region15: #{tpu_custom_call.1} parent=1 // pred_check_branch
      %24 = sbr.rel (0) target = $region17
    $region16: #{tpu_custom_call.1} parent=1 // pred_region
      _
    $region17: #{tpu_custom_call.1} parent=1 // pred_fallthru
      _
    // Predicated region
    $region18: #{tpu_custom_call.1} parent=1 // pred_check
      _
    $region19: #{tpu_custom_call.1} parent=1 // pred_check_branch
      %26 = sbr.rel (0) target = $region21
    $region20: #{tpu_custom_call.1} parent=1 // pred_region
      _
    $region21: #{tpu_custom_call.1} parent=1 // pred_fallthru
      _
    // Predicated region
    $region22: #{tpu_custom_call.1} parent=1 // pred_check
      _
    $region23: #{tpu_custom_call.1} parent=1 // pred_check_branch
      %28 = sbr.rel (0) target = $region25
    $region24: #{tpu_custom_call.1} parent=1 // pred_region
      _
    $region25: #{tpu_custom_call.1} parent=1 // pred_fallthru
      _
    // Predicated region
    $region26: #{tpu_custom_call.1} parent=1 // pred_check
      _
    $region27: #{tpu_custom_call.1} parent=1 // pred_check_branch
      %30 = sbr.rel (0) target = $region29
    $region28: #{tpu_custom_call.1} parent=1 // pred_region
      _
    $region29: #{tpu_custom_call.1} parent=1 // pred_fallthru
      _
    // Predicated region
    $region30: #{tpu_custom_call.1} parent=1 // pred_check
      _
    $region31: #{tpu_custom_call.1} parent=1 // pred_check_branch
      %32 = sbr.rel (0) target = $region33
    $region32: #{tpu_custom_call.1} parent=1 // pred_region
      _
    $region33: #{tpu_custom_call.1} parent=1 // pred_fallthru
      _
    %v33 = vld [vmem:[%s0] sm:$0x1]
    %v34 = vld [vmem:[%s2] sm:$0xff]
    %v35 = vld [vmem:[%s2 + $0x8] sm:$0xff]
    %v36 = vld [vmem:[%s3] sm:$0x1]
    %vm37 = vcmask 130048
    %v39 = vsel %vm37, %v33, 0
    %41 = vmatprep.subr.mxu0 0.0
    %42 = vmatpush1.msra.mxu0 %v34
    %43 = vmatprep.subr.mxu0 0.0
    %44 = vmatpush1.msra.mxu0 %v35
    %45 = vmatprep.subr.mxu0 0.0
    %46 = vmatpush1.msra.mxu0 0.0
    %47 = vmatprep.subr.mxu0 0.0
    %48 = vmatpush1.msra.mxu0 0.0
    %49 = vmatprep.subr.mxu0 0.0
    %50 = vmatpush1.msra.mxu0 0.0
    %51 = vmatprep.subr.mxu0 0.0
    %52 = vmatpush1.msra.mxu0 0.0
    %53 = vmatprep.subr.mxu0 0.0
    %54 = vmatpush1.msra.mxu0 0.0
    %55 = vmatprep.subr.mxu0 0.0
    %56 = vmatpush1.msra.mxu0 0.0
    %57 = vmatprep.subr.mxu0 0.0
    %58 = vmatpush1.msra.mxu0 0.0
    %59 = vmatprep.subr.mxu0 0.0
    %60 = vmatpush1.msra.mxu0 0.0
    %61 = vmatprep.subr.mxu0 0.0
    %62 = vmatpush1.msra.mxu0 0.0
    %63 = vmatprep.subr.mxu0 0.0
    %64 = vmatpush1.msra.mxu0 0.0
    %65 = vmatprep.subr.mxu0 0.0
    %66 = vmatpush1.msra.mxu0 0.0
    %67 = vmatprep.subr.mxu0 0.0
    %68 = vmatpush1.msra.mxu0 0.0
    %69 = vmatprep.subr.mxu0 0.0
    %70 = vmatpush1.msra.mxu0 0.0
    %71 = vmatprep.subr.mxu0 0.0
    %72 = vmatpush1.msra.mxu0 0.0
    %73 = vmatprep.subr.mxu0 0.0
    %74 = vmatpush1.msra.mxu0 0.0
    %75 = vmatprep.subr.mxu0 0.0
    %76 = vmatpush1.msra.mxu0 0.0
    %77 = vmatprep.subr.mxu0 0.0
    %78 = vmatpush1.msra.mxu0 0.0
    %79 = vmatprep.subr.mxu0 0.0
    %80 = vmatpush1.msra.mxu0 0.0
    %81 = vmatprep.subr.mxu0 0.0
    %82 = vmatpush1.msra.mxu0 0.0
    %83 = vmatprep.subr.mxu0 0.0
    %84 = vmatpush1.msra.mxu0 0.0
    %85 = vmatprep.subr.mxu0 0.0
    %86 = vmatpush1.msra.mxu0 0.0
    %87 = vmatprep.subr.mxu0 0.0
    %88 = vmatpush1.msra.mxu0 0.0
    %89 = vmatprep.subr.mxu0 0.0
    %90 = vmatpush1.msra.mxu0 0.0
    %91 = vmatprep.subr.mxu0 0.0
    %92 = vmatpush1.msra.mxu0 0.0
    %93 = vmatprep.subr.mxu0 0.0
    %94 = vmatpush1.msra.mxu0 0.0
    %95 = vmatprep.subr.mxu0 0.0
    %96 = vmatpush1.msra.mxu0 0.0
    %97 = vmatprep.subr.mxu0 0.0
    %98 = vmatpush1.msra.mxu0 0.0
    %99 = vmatprep.subr.mxu0 0.0
    %100 = vmatpush1.msra.mxu0 0.0
    %101 = vmatprep.subr.mxu0 0.0
    %102 = vmatpush1.msra.mxu0 0.0
    %103 = vmatprep.subr.mxu0 0.0
    %104 = vmatpush1.msra.mxu0 0.0
    %105 = vmatprep.mubr.f32.mxu0 0.0
    %106 = vmatmul.mubr.f32.gmra.mrb[0].mxu0 %v39
    %v107 = vpop.f32.mrb[0].mxu0
    %v108 = vadd.f32 %v36, %v107
    %v109 = vpop.f32.mrb[0].mxu0
    %110 = vdwg.mxu0
    %vm111 = vcmask 778240
    %112 = vst.msk [vmem:[#allocation2] sm:$0x1] %vm111, %v108
    %v113 = vld [vmem:[%s4] sm:$0xff]
    %v114 = vld [vmem:[%s4 + $0x8] sm:$0xff]
    %v115 = vld [vmem:[%s4 + $0x10] sm:$0xff]
    %v116 = vld [vmem:[%s4 + $0x18] sm:$0xff]
    %v117 = vld [vmem:[%s5] sm:$0x1]
    %v118 = vld [vmem:[%s1] sm:$0x1]
    %v119 = vld [vmem:[#allocation2] sm:$0x1]
    %vm120 = vcmask 261120
    %v122 = vsel %vm120, %v118, 0
    %124 = vmatprep.subr.mxu0 0.0
    %125 = vmatpush1.msra.mxu0 %v113
    %126 = vmatprep.subr.mxu0 0.0
    %127 = vmatpush1.msra.mxu0 %v114
    %128 = vmatprep.subr.mxu0 0.0
    %129 = vmatpush1.msra.mxu0 %v115
    %130 = vmatprep.subr.mxu0 0.0
    %131 = vmatpush1.msra.mxu0 %v116
    %132 = vmatprep.subr.mxu0 0.0
    %133 = vmatpush1.msra.mxu0 0.0
    %134 = vmatprep.subr.mxu0 0.0
    %135 = vmatpush1.msra.mxu0 0.0
    %136 = vmatprep.subr.mxu0 0.0
    %137 = vmatpush1.msra.mxu0 0.0
    %138 = vmatprep.subr.mxu0 0.0
    %139 = vmatpush1.msra.mxu0 0.0
    %140 = vmatprep.subr.mxu0 0.0
    %141 = vmatpush1.msra.mxu0 0.0
    %142 = vmatprep.subr.mxu0 0.0
    %143 = vmatpush1.msra.mxu0 0.0
    %144 = vmatprep.subr.mxu0 0.0
    %145 = vmatpush1.msra.mxu0 0.0
    %146 = vmatprep.subr.mxu0 0.0
    %147 = vmatpush1.msra.mxu0 0.0
    %148 = vmatprep.subr.mxu0 0.0
    %149 = vmatpush1.msra.mxu0 0.0
    %150 = vmatprep.subr.mxu0 0.0
    %151 = vmatpush1.msra.mxu0 0.0
    %152 = vmatprep.subr.mxu0 0.0
    %153 = vmatpush1.msra.mxu0 0.0
    %154 = vmatprep.subr.mxu0 0.0
    %155 = vmatpush1.msra.mxu0 0.0
    %156 = vmatprep.subr.mxu0 0.0
    %157 = vmatpush1.msra.mxu0 0.0
    %158 = vmatprep.subr.mxu0 0.0
    %159 = vmatpush1.msra.mxu0 0.0
    %160 = vmatprep.subr.mxu0 0.0
    %161 = vmatpush1.msra.mxu0 0.0
    %162 = vmatprep.subr.mxu0 0.0
    %163 = vmatpush1.msra.mxu0 0.0
    %164 = vmatprep.subr.mxu0 0.0
    %165 = vmatpush1.msra.mxu0 0.0
    %166 = vmatprep.subr.mxu0 0.0
    %167 = vmatpush1.msra.mxu0 0.0
    %168 = vmatprep.subr.mxu0 0.0
    %169 = vmatpush1.msra.mxu0 0.0
    %170 = vmatprep.subr.mxu0 0.0
    %171 = vmatpush1.msra.mxu0 0.0
    %172 = vmatprep.subr.mxu0 0.0
    %173 = vmatpush1.msra.mxu0 0.0
    %174 = vmatprep.subr.mxu0 0.0
    %175 = vmatpush1.msra.mxu0 0.0
    %176 = vmatprep.subr.mxu0 0.0
    %177 = vmatpush1.msra.mxu0 0.0
    %178 = vmatprep.subr.mxu0 0.0
    %179 = vmatpush1.msra.mxu0 0.0
    %180 = vmatprep.subr.mxu0 0.0
    %181 = vmatpush1.msra.mxu0 0.0
    %182 = vmatprep.subr.mxu0 0.0
    %183 = vmatpush1.msra.mxu0 0.0
    %184 = vmatprep.subr.mxu0 0.0
    %185 = vmatpush1.msra.mxu0 0.0
    %186 = vmatprep.subr.mxu0 0.0
    %187 = vmatpush1.msra.mxu0 0.0
    %188 = vmatprep.mubr.f32.mxu0 0.0
    %189 = vmatmul.mubr.f32.gmra.mrb[0].mxu0 %v122
    %v190 = vpop.f32.mrb[0].mxu0
    %v191 = vadd.f32 0.0, %v190
    %v192 = vpop.f32.mrb[0].mxu0
    %193 = vdwg.mxu0
    %v194 = vadd.f32 %v119, %v191
    %v195 = vxor.u32 %v194, 2147483648
    %v196 = vmul.f32 %v195, 1.442695
    %v197 = vpow.pop %v196
    %v198 = vadd.f32 %v197, 1.0
    %v199 = vrcp.pop %v198
    %v200 = vmul.f32 1.0, %v199
    %v202 = vlaneseq
    %v203 = vshrl.u32 %v202, 7
    %v204 = vsub.s32 0, %v203
    %v205 = vrot.slane %v117, %v204
    %206 = vrot.lane.b32.xlu0 %v205, 64
    %v207 = vpop.permute.xlu0 %206
    %v209 = vadd.f32 %v191, %v207
    %v212 = vunpack.c.l.s4 1966171168
    %v213 = vunpack.c.0.s8 %v212
    %v214 = vlaneseq
    %v215 = vshrl.u32 %v214, 7
    %v216 = vsub.s32 %v213, %v215
    %v217 = vrot.slane %v209, %v216
    %v219 = vunpack.c.l.s4 1966171168
    %v220 = vunpack.c.0.s8 %v219
    %v221 = vlaneseq
    %v222 = vshrl.u32 %v221, 7
    %v223 = vsub.s32 %v220, %v222
    %v224 = vrot.slane %v217, %v223
    %225 = vrot.lane.b32.xlu0 %v224, 64
    %v226 = vpop.permute.xlu0 %225
    %v228 = vmul.f32 %v200, %v226
    %230 = vrot.lane.b32.xlu0 %v228, 64
    %v231 = vpop.permute.xlu0 %230
    %v233 = vadd.f32 %v119, %v231
    %v234 = vtanh.pop %v233
    %236 = vrot.lane.b32.xlu0 %v234, 64
    %v237 = vpop.permute.xlu0 %236
    %v239 = vsub.f32 %v118, %v237
    %241 = vrot.lane.b32.xlu0 %v239, 32
    %v242 = vpop.permute.xlu0 %241
    %v244 = vmul.f32 %v200, %v242
    %246 = vrot.lane.b32.xlu0 %v244, 32
    %v247 = vpop.permute.xlu0 %246
    %v249 = vadd.f32 %v234, %v247
    %v251 = vlaneseq
    %v252 = vshrl.u32 %v251, 7
    %v253 = vsub.s32 0, %v252
    %v254 = vrot.slane %v249, %v253
    %255 = vrot.lane.b32.xlu0 %v254, 64
    %v256 = vpop.permute.xlu0 %255
    %vm258 = vcmask 253952
    %259 = vst.msk [vmem:[#allocation3] sm:$0x1] %vm258, %v256
    %260 = vst.msk [vmem:[#allocation6] sm:$0x1] %vm258, %v256
    %v261 = vld [vmem:[#allocation3] sm:$0x1]
    %v262 = vld [vmem:[%s6] sm:$0xff]
    %v263 = vld [vmem:[%s6 + $0x8] sm:$0xff]
    %v264 = vld [vmem:[%s6 + $0x10] sm:$0xff]
    %v265 = vld [vmem:[%s6 + $0x18] sm:$0xff]
    %v266 = vld [vmem:[%s7] sm:$0x1]
    %v268 = vsel %vm120, %v261, 0
    %270 = vmatprep.subr.mxu0 0.0
    %271 = vmatpush1.msra.mxu0 %v262
    %272 = vmatprep.subr.mxu0 0.0
    %273 = vmatpush1.msra.mxu0 %v263
    %274 = vmatprep.subr.mxu0 0.0
    %275 = vmatpush1.msra.mxu0 %v264
    %276 = vmatprep.subr.mxu0 0.0
    %277 = vmatpush1.msra.mxu0 %v265
    %278 = vmatprep.subr.mxu0 0.0
    %279 = vmatpush1.msra.mxu0 0.0
    %280 = vmatprep.subr.mxu0 0.0
    %281 = vmatpush1.msra.mxu0 0.0
    %282 = vmatprep.subr.mxu0 0.0
    %283 = vmatpush1.msra.mxu0 0.0
    %284 = vmatprep.subr.mxu0 0.0
    %285 = vmatpush1.msra.mxu0 0.0
    %286 = vmatprep.subr.mxu0 0.0
    %287 = vmatpush1.msra.mxu0 0.0
    %288 = vmatprep.subr.mxu0 0.0
    %289 = vmatpush1.msra.mxu0 0.0
    %290 = vmatprep.subr.mxu0 0.0
    %291 = vmatpush1.msra.mxu0 0.0
    %292 = vmatprep.subr.mxu0 0.0
    %293 = vmatpush1.msra.mxu0 0.0
    %294 = vmatprep.subr.mxu0 0.0
    %295 = vmatpush1.msra.mxu0 0.0
    %296 = vmatprep.subr.mxu0 0.0
    %297 = vmatpush1.msra.mxu0 0.0
    %298 = vmatprep.subr.mxu0 0.0
    %299 = vmatpush1.msra.mxu0 0.0
    %300 = vmatprep.subr.mxu0 0.0
    %301 = vmatpush1.msra.mxu0 0.0
    %302 = vmatprep.subr.mxu0 0.0
    %303 = vmatpush1.msra.mxu0 0.0
    %304 = vmatprep.subr.mxu0 0.0
    %305 = vmatpush1.msra.mxu0 0.0
    %306 = vmatprep.subr.mxu0 0.0
    %307 = vmatpush1.msra.mxu0 0.0
    %308 = vmatprep.subr.mxu0 0.0
    %309 = vmatpush1.msra.mxu0 0.0
    %310 = vmatprep.subr.mxu0 0.0
    %311 = vmatpush1.msra.mxu0 0.0
    %312 = vmatprep.subr.mxu0 0.0
    %313 = vmatpush1.msra.mxu0 0.0
    %314 = vmatprep.subr.mxu0 0.0
    %315 = vmatpush1.msra.mxu0 0.0
    %316 = vmatprep.subr.mxu0 0.0
    %317 = vmatpush1.msra.mxu0 0.0
    %318 = vmatprep.subr.mxu0 0.0
    %319 = vmatpush1.msra.mxu0 0.0
    %320 = vmatprep.subr.mxu0 0.0
    %321 = vmatpush1.msra.mxu0 0.0
    %322 = vmatprep.subr.mxu0 0.0
    %323 = vmatpush1.msra.mxu0 0.0
    %324 = vmatprep.subr.mxu0 0.0
    %325 = vmatpush1.msra.mxu0 0.0
    %326 = vmatprep.subr.mxu0 0.0
    %327 = vmatpush1.msra.mxu0 0.0
    %328 = vmatprep.subr.mxu0 0.0
    %329 = vmatpush1.msra.mxu0 0.0
    %330 = vmatprep.subr.mxu0 0.0
    %331 = vmatpush1.msra.mxu0 0.0
    %332 = vmatprep.subr.mxu0 0.0
    %333 = vmatpush1.msra.mxu0 0.0
    %334 = vmatprep.mubr.f32.mxu0 0.0
    %335 = vmatmul.mubr.f32.gmra.mrb[0].mxu0 %v268
    %v336 = vpop.f32.mrb[0].mxu0
    %v337 = vadd.f32 %v266, %v336
    %v338 = vpop.f32.mrb[0].mxu0
    %339 = vdwg.mxu0
    %vm340 = vcmask 122880
    %341 = vst.msk [vmem:[#allocation4] sm:$0x1] %vm340, %v337
    // Predicated region
    $region34: #{tpu_custom_call.1} parent=1 // pred_check
      _
    $region35: #{tpu_custom_call.1} parent=1 // pred_check_branch
      %343 = sbr.rel (0) target = $region37
    $region36: #{tpu_custom_call.1} parent=1 // pred_region
      %s345 = ssub.s32 16, 16
      %346 = vsyncadd [#allocation5], %s345
      %s348 = sshll.u32 [#allocation4], 4
      %s349 = int_to_ptr.vmem [resolvable:$true] %s348
      %351 = dma.vmem_to_hbm [thread:$0]  %s349, 16, %s8, [#allocation5]
    $region37: #{tpu_custom_call.1} parent=1 // pred_fallthru
      _
    // Predicated region
    $region38: #{tpu_custom_call.1} parent=1 // pred_check
      _
    $region39: #{tpu_custom_call.1} parent=1 // pred_check_branch
      %353 = sbr.rel (0) target = $region41
    $region40: #{tpu_custom_call.1} parent=1 // pred_region
      %s355 = ssub.s32 16, 16
      %356 = vsyncadd [#allocation7], %s355
      %s358 = sshll.u32 [#allocation6], 4
      %s359 = int_to_ptr.vmem [resolvable:$true] %s358
      %361 = dma.vmem_to_hbm [thread:$0]  %s359, 16, %s9, [#allocation7]
    $region41: #{tpu_custom_call.1} parent=1 // pred_fallthru
      _
    // Predicated region
    $region42: #{tpu_custom_call.1} parent=1 // pred_check
      _
    $region43: #{tpu_custom_call.1} parent=1 // pred_check_branch
      %363 = sbr.rel (0) target = $region45
    $region44: #{tpu_custom_call.1} parent=1 // pred_region
      %364 = dma.done [#allocation5], 16
    $region45: #{tpu_custom_call.1} parent=1 // pred_fallthru
      _
    // Predicated region
    $region46: #{tpu_custom_call.1} parent=1 // pred_check
      _
    $region47: #{tpu_custom_call.1} parent=1 // pred_check_branch
      %366 = sbr.rel (0) target = $region49
    $region48: #{tpu_custom_call.1} parent=1 // pred_region
      %367 = dma.done [#allocation7], 16
    $region49: #{tpu_custom_call.1} parent=1 // pred_fallthru
      _
    %368 = vsyncpa [#allocation5], 1
    %369 = vsyncpa [#allocation7], 1

</llo_original>
